<compile_context>
chip_gen: v7x
topology: tpu7x:2x2x1
jax: 0.10.0
libtpu: 0.0.40
codegen_flags: <defaults>
</compile_context>

<pallas_src>
import jax
import jax.numpy as jnp
from jax import lax
from jax.experimental import pallas as pl
from jax.experimental.pallas import tpu as pltpu


def _dwconv_kernel(x_ref, w_ref, b_ref, o_ref):
    # x_ref : (1, H, W, TC)   one batch element, one channel tile (pipelined)
    # w_ref : (3, 3, TC)      depthwise taps
    # b_ref : (1, TC)         bias
    # o_ref : (1, H, W, TC)
    _, H, W, TC = o_ref.shape
    f32 = jnp.float32

    # Hoisted f32 taps / bias (tiny, traced once).
    taps = [[w_ref[kh, kw:kw + 1, :].astype(f32) for kw in range(3)]
            for kh in range(3)]                       # each (1, TC)
    bias = b_ref[...].astype(f32)                     # (1, TC)

    # W-direction (column) shift helpers on a (W, TC) f32 row.
    col = lax.broadcasted_iota(jnp.int32, (W, 1), 0)
    has_left = col >= 1          # output col w has an input neighbour w-1
    has_right = col <= W - 2     # output col w has an input neighbour w+1

    if W == 1:
        def from_left(t):
            return jnp.zeros_like(t)
        from_right = from_left
    elif W % 8 == 0:
        # XLU sublane rotate + border mask: 1 roll + 1 select per partial sum.
        def from_left(t):        # out[w] = t[w-1], 0 at w == 0
            return jnp.where(has_left, pltpu.roll(t, 1, axis=0), 0.0)

        def from_right(t):       # out[w] = t[w+1], 0 at w == W-1
            return jnp.where(has_right, pltpu.roll(t, W - 1, axis=0), 0.0)
    else:
        # Ragged W: build the shift with a zero-row concat (vreg-level).
        zrow = jnp.zeros((1, TC), f32)

        def from_left(t):
            return jnp.concatenate([zrow, t[:W - 1, :]], axis=0)

        def from_right(t):
            return jnp.concatenate([t[1:, :], zrow], axis=0)

    def wsum(rows, kw):
        # rows: list of (kh, (W, TC) f32 row) -> sum_kh tap[kh][kw] * row
        acc = rows[0][1] * taps[rows[0][0]][kw]
        for kh, r in rows[1:]:
            acc = acc + r * taps[kh][kw]
        return acc

    def compute_row(h_out, pairs):
        # pairs: (kh, input_row) for every kernel row whose input row exists;
        # out-of-image kernel rows are simply dropped (zero padding).
        rows = [(kh, x_ref[0, h_in, :, :].astype(f32)) for kh, h_in in pairs]
        acc = wsum(rows, 1)                        # centre column taps
        acc = acc + from_left(wsum(rows, 0))       # left taps: in col w-1
        acc = acc + from_right(wsum(rows, 2))      # right taps: in col w+1
        acc = acc + bias
        o_ref[0, h_out, :, :] = acc.astype(o_ref.dtype)

    if H == 1:
        compute_row(0, [(1, 0)])
        return

    # Statically specialised border rows (no halo buffer, no masking).
    compute_row(0, [(1, 0), (2, 1)])

    n_main = H - 2                       # interior output rows 1 .. H-2
    UNROLL = 8
    n_blk, rem = divmod(n_main, UNROLL)

    def main_rows(h0):
        for j in range(UNROLL):
            h = h0 + j
            compute_row(h, [(0, h - 1), (1, h), (2, h + 1)])

    if n_blk <= 4:
        for i in range(n_blk):           # static unroll: full scheduler window
            main_rows(1 + i * UNROLL)
    else:
        @pl.loop(0, n_blk)
        def _(i):
            main_rows(1 + pl.multiple_of(i * UNROLL, UNROLL))

    for j in range(rem):                 # short static tail for ragged H
        h = 1 + n_blk * UNROLL + j
        compute_row(h, [(0, h - 1), (1, h), (2, h + 1)])

    compute_row(H - 1, [(0, H - 2), (1, H - 1)])


def _choose_channel_tile(Cp, H, W, itemsize):
    """Largest multiple-of-128 channel tile dividing Cp such that the TOTAL
    per-step VMEM (2x double-buffered input block + 2x output block; weights
    and bias are negligible) stays around <= 24 MiB.  That leaves pipelining
    headroom under v7x's 64 MiB per-core VMEM while still giving fat,
    grid-overhead-amortising blocks on v5e/v6e (128 MiB)."""
    per128 = 4 * H * W * 128 * itemsize
    budget = 24 * 1024 * 1024
    kmax = max(1, budget // max(per128, 1))
    k = min(Cp // 128, kmax)
    while (Cp // 128) % k:
        k -= 1
    return 128 * k
    # TODO(synk): for very large H*W (a single 128-channel block > ~24 MiB) add
    # a grid-level row-tile axis with a 1-row halo re-read.


def dwconv(x, weight, bias, H, W):
    """x: (B, N, C) with N == H*W.  weight: (C, 1, 3, 3) (PyTorch depthwise).
    bias: (C,).  Returns (B, N, C)."""
    B, N, C = x.shape
    assert N == H * W
    x_nhwc = x.reshape(B, H, W, C)                      # (B, N, C) -> NHWC
    w = jnp.transpose(weight[:, 0, :, :], (1, 2, 0))    # (C,1,3,3) -> (3,3,C)
    b = bias.reshape(1, C)

    # Pad channels to a multiple of 128: lane-dense blocks -> unmasked stores.
    Cp = ((C + 127) // 128) * 128
    if Cp != C:
        pad = Cp - C
        x_nhwc = jnp.pad(x_nhwc, ((0, 0), (0, 0), (0, 0), (0, pad)))
        w = jnp.pad(w, ((0, 0), (0, 0), (0, pad)))
        b = jnp.pad(b, ((0, 0), (0, pad)))

    TC = _choose_channel_tile(Cp, H, W, x.dtype.itemsize)
    # Channel tile outer, batch inner: weight/bias block indices are constant
    # across consecutive steps, so their (small) DMAs are skipped.
    grid = (Cp // TC, B)

    out = pl.pallas_call(
        _dwconv_kernel,
        out_shape=jax.ShapeDtypeStruct((B, H, W, Cp), x.dtype),
        grid_spec=pltpu.PrefetchScalarGridSpec(
            num_scalar_prefetch=0,
            grid=grid,
            in_specs=[
                pl.BlockSpec((1, H, W, TC), lambda ci, bi: (bi, 0, 0, ci)),
                pl.BlockSpec((3, 3, TC), lambda ci, bi: (0, 0, ci)),
                pl.BlockSpec((1, TC), lambda ci, bi: (0, ci)),
            ],
            out_specs=pl.BlockSpec((1, H, W, TC), lambda ci, bi: (bi, 0, 0, ci)),
        ),
        compiler_params=pltpu.CompilerParams(
            dimension_semantics=("parallel", "parallel"),
            vmem_limit_bytes=48 * 1024 * 1024,
        ),
    )(x_nhwc, w, b)

    if Cp != C:
        out = out[..., :C]
    return out.reshape(B, N, C)


def _reference(x, weight, bias, H, W):
    # Pure-JAX reference using lax depthwise conv (NCHW, groups=C).
    B, N, C = x.shape
    x_nchw = jnp.transpose(x, (0, 2, 1)).reshape(B, C, H, W)
    y = lax.conv_general_dilated(
        x_nchw, weight,
        window_strides=(1, 1), padding=((1, 1), (1, 1)),
        dimension_numbers=("NCHW", "OIHW", "NCHW"),
        feature_group_count=C,
    ) + bias.reshape(1, C, 1, 1)
    return jnp.transpose(y.reshape(B, C, N), (0, 2, 1))


if __name__ == "__main__":
    B, C, H, W = 2, 128, 8, 8   # C multiple of 128 -> lane-dense blocks
    N = H * W

    key = jax.random.PRNGKey(0)
    kx, kw_, kb = jax.random.split(key, 3)
    x = jax.random.normal(kx, (B, N, C), dtype=jnp.float32)
    # nn.Conv2d(dim, dim, 3, 1, 1, groups=dim) -> weight (dim,1,3,3), bias (dim,)
    weight = jax.random.normal(kw_, (C, 1, 3, 3), dtype=jnp.float32) * 0.1
    bias = jax.random.normal(kb, (C,), dtype=jnp.float32) * 0.1

    y = jax.block_until_ready(dwconv(x, weight, bias, H, W))

    y_ref = _reference(x, weight, bias, H, W)
    assert y.shape == (B, N, C)
    assert jnp.allclose(y, y_ref, atol=1e-5, rtol=1e-5), "mismatch vs reference"

    print("KERNEL_OK")
</pallas_src>

<mosaic_0001>
module attributes {stable_mosaic.version = 11 : i64} {
  func.func @_dwconv_kernel(%arg0: i32, %arg1: i32, %arg2: memref<1x8x8x128xf32, #tpu.memory_space<vmem>>, %arg3: memref<3x3x128xf32, #tpu.memory_space<vmem>>, %arg4: memref<1x128xf32, #tpu.memory_space<vmem>>, %arg5: memref<1x8x8x128xf32, #tpu.memory_space<vmem>>) attributes {dimension_semantics = [#tpu.dimension_semantics<parallel>, #tpu.dimension_semantics<parallel>], iteration_bounds = array<i64: 1, 2>, scalar_prefetch = 0 : i64, scratch_operands = 0 : i64, tpu.core_type = #tpu.core_type<tc>, window_params = [{transform_indices = @transform_0, window_bounds = array<i64: 1, 8, 8, 128>}, {transform_indices = @transform_1, window_bounds = array<i64: 3, 3, 128>}, {transform_indices = @transform_2, window_bounds = array<i64: 1, 128>}, {transform_indices = @transform_3, window_bounds = array<i64: 1, 8, 8, 128>}]} {
    %c0 = arith.constant 0 : index
    %c0_0 = arith.constant 0 : index
    %c0_1 = arith.constant 0 : index
    %0 = vector.load %arg3[%c0, %c0_0, %c0_1] : memref<3x3x128xf32, #tpu.memory_space<vmem>>, vector<1x1x128xf32>
    %1 = vector.shape_cast %0 : vector<1x1x128xf32> to vector<1x128xf32>
    %c0_2 = arith.constant 0 : index
    %c1 = arith.constant 1 : index
    %c0_3 = arith.constant 0 : index
    %2 = vector.load %arg3[%c0_2, %c1, %c0_3] : memref<3x3x128xf32, #tpu.memory_space<vmem>>, vector<1x1x128xf32>
    %3 = vector.shape_cast %2 : vector<1x1x128xf32> to vector<1x128xf32>
    %c0_4 = arith.constant 0 : index
    %c2 = arith.constant 2 : index
    %c0_5 = arith.constant 0 : index
    %4 = vector.load %arg3[%c0_4, %c2, %c0_5] : memref<3x3x128xf32, #tpu.memory_space<vmem>>, vector<1x1x128xf32>
    %5 = vector.shape_cast %4 : vector<1x1x128xf32> to vector<1x128xf32>
    %c1_6 = arith.constant 1 : index
    %c0_7 = arith.constant 0 : index
    %c0_8 = arith.constant 0 : index
    %6 = vector.load %arg3[%c1_6, %c0_7, %c0_8] : memref<3x3x128xf32, #tpu.memory_space<vmem>>, vector<1x1x128xf32>
    %7 = vector.shape_cast %6 : vector<1x1x128xf32> to vector<1x128xf32>
    %c1_9 = arith.constant 1 : index
    %c1_10 = arith.constant 1 : index
    %c0_11 = arith.constant 0 : index
    %8 = vector.load %arg3[%c1_9, %c1_10, %c0_11] : memref<3x3x128xf32, #tpu.memory_space<vmem>>, vector<1x1x128xf32>
    %9 = vector.shape_cast %8 : vector<1x1x128xf32> to vector<1x128xf32>
    %c1_12 = arith.constant 1 : index
    %c2_13 = arith.constant 2 : index
    %c0_14 = arith.constant 0 : index
    %10 = vector.load %arg3[%c1_12, %c2_13, %c0_14] : memref<3x3x128xf32, #tpu.memory_space<vmem>>, vector<1x1x128xf32>
    %11 = vector.shape_cast %10 : vector<1x1x128xf32> to vector<1x128xf32>
    %c2_15 = arith.constant 2 : index
    %c0_16 = arith.constant 0 : index
    %c0_17 = arith.constant 0 : index
    %12 = vector.load %arg3[%c2_15, %c0_16, %c0_17] : memref<3x3x128xf32, #tpu.memory_space<vmem>>, vector<1x1x128xf32>
    %13 = vector.shape_cast %12 : vector<1x1x128xf32> to vector<1x128xf32>
    %c2_18 = arith.constant 2 : index
    %c1_19 = arith.constant 1 : index
    %c0_20 = arith.constant 0 : index
    %14 = vector.load %arg3[%c2_18, %c1_19, %c0_20] : memref<3x3x128xf32, #tpu.memory_space<vmem>>, vector<1x1x128xf32>
    %15 = vector.shape_cast %14 : vector<1x1x128xf32> to vector<1x128xf32>
    %c2_21 = arith.constant 2 : index
    %c2_22 = arith.constant 2 : index
    %c0_23 = arith.constant 0 : index
    %16 = vector.load %arg3[%c2_21, %c2_22, %c0_23] : memref<3x3x128xf32, #tpu.memory_space<vmem>>, vector<1x1x128xf32>
    %17 = vector.shape_cast %16 : vector<1x1x128xf32> to vector<1x128xf32>
    %c0_24 = arith.constant 0 : index
    %c0_25 = arith.constant 0 : index
    %18 = vector.load %arg4[%c0_24, %c0_25] : memref<1x128xf32, #tpu.memory_space<vmem>>, vector<1x128xf32>
    %19 = tpu.iota {dimensions = array<i32: 0>} : vector<8x1xi32>
    %c1_i32 = arith.constant 1 : i32
    %20 = vector.broadcast %c1_i32 : i32 to vector<8x1xi32>
    %21 = arith.cmpi sge, %19, %20 : vector<8x1xi32>
    %c6_i32 = arith.constant 6 : i32
    %22 = vector.broadcast %c6_i32 : i32 to vector<8x1xi32>
    %23 = arith.cmpi sle, %19, %22 : vector<8x1xi32>
    %c0_26 = arith.constant 0 : index
    %c0_27 = arith.constant 0 : index
    %c0_28 = arith.constant 0 : index
    %c0_29 = arith.constant 0 : index
    %24 = vector.load %arg2[%c0_26, %c0_27, %c0_28, %c0_29] : memref<1x8x8x128xf32, #tpu.memory_space<vmem>>, vector<1x1x8x128xf32>
    %25 = vector.shape_cast %24 : vector<1x1x8x128xf32> to vector<8x128xf32>
    %c0_30 = arith.constant 0 : index
    %c1_31 = arith.constant 1 : index
    %c0_32 = arith.constant 0 : index
    %c0_33 = arith.constant 0 : index
    %26 = vector.load %arg2[%c0_30, %c1_31, %c0_32, %c0_33] : memref<1x8x8x128xf32, #tpu.memory_space<vmem>>, vector<1x1x8x128xf32>
    %27 = vector.shape_cast %26 : vector<1x1x8x128xf32> to vector<8x128xf32>
    %28 = vector.broadcast %9 : vector<1x128xf32> to vector<8x128xf32>
    %29 = arith.mulf %25, %28 : vector<8x128xf32>
    %30 = vector.broadcast %15 : vector<1x128xf32> to vector<8x128xf32>
    %31 = arith.mulf %27, %30 : vector<8x128xf32>
    %32 = arith.addf %29, %31 : vector<8x128xf32>
    %33 = vector.broadcast %7 : vector<1x128xf32> to vector<8x128xf32>
    %34 = arith.mulf %25, %33 : vector<8x128xf32>
    %35 = vector.broadcast %13 : vector<1x128xf32> to vector<8x128xf32>
    %36 = arith.mulf %27, %35 : vector<8x128xf32>
    %37 = arith.addf %34, %36 : vector<8x128xf32>
    %c1_i32_34 = arith.constant 1 : i32
    %38 = tpu.dynamic_rotate %37 by %c1_i32_34 dim 0 : vector<8x128xf32>, i32 -> vector<8x128xf32>
    %cst = arith.constant 0.000000e+00 : f32
    %39 = vector.shape_cast %21 : vector<8x1xi1> to vector<8x1xi1>
    %40 = vector.broadcast %39 : vector<8x1xi1> to vector<8x128xi1>
    %41 = vector.broadcast %cst : f32 to vector<8x128xf32>
    %42 = arith.select %40, %38, %41 : vector<8x128xi1>, vector<8x128xf32>
    %43 = arith.addf %32, %42 : vector<8x128xf32>
    %44 = vector.broadcast %11 : vector<1x128xf32> to vector<8x128xf32>
    %45 = arith.mulf %25, %44 : vector<8x128xf32>
    %46 = vector.broadcast %17 : vector<1x128xf32> to vector<8x128xf32>
    %47 = arith.mulf %27, %46 : vector<8x128xf32>
    %48 = arith.addf %45, %47 : vector<8x128xf32>
    %c7_i32 = arith.constant 7 : i32
    %49 = tpu.dynamic_rotate %48 by %c7_i32 dim 0 : vector<8x128xf32>, i32 -> vector<8x128xf32>
    %cst_35 = arith.constant 0.000000e+00 : f32
    %50 = vector.shape_cast %23 : vector<8x1xi1> to vector<8x1xi1>
    %51 = vector.broadcast %50 : vector<8x1xi1> to vector<8x128xi1>
    %52 = vector.broadcast %cst_35 : f32 to vector<8x128xf32>
    %53 = arith.select %51, %49, %52 : vector<8x128xi1>, vector<8x128xf32>
    %54 = arith.addf %43, %53 : vector<8x128xf32>
    %55 = vector.broadcast %18 : vector<1x128xf32> to vector<8x128xf32>
    %56 = arith.addf %54, %55 : vector<8x128xf32>
    %c0_36 = arith.constant 0 : index
    %c0_37 = arith.constant 0 : index
    %c0_38 = arith.constant 0 : index
    %c0_39 = arith.constant 0 : index
    %57 = vector.load %arg5[%c0_36, %c0_37, %c0_38, %c0_39] : memref<1x8x8x128xf32, #tpu.memory_space<vmem>>, vector<1x1x8x128xf32>
    %58 = vector.shape_cast %57 : vector<1x1x8x128xf32> to vector<8x128xf32>
    %59 = vector.shape_cast %56 : vector<8x128xf32> to vector<1x1x8x128xf32>
    tpu.vector_store %arg5[%c0_36, %c0_37, %c0_38, %c0_39], %59 {strides = array<i32>} : memref<1x8x8x128xf32, #tpu.memory_space<vmem>>, vector<1x1x8x128xf32>,
    %c0_40 = arith.constant 0 : index
    %c0_41 = arith.constant 0 : index
    %c0_42 = arith.constant 0 : index
    %c0_43 = arith.constant 0 : index
    %60 = vector.load %arg2[%c0_40, %c0_41, %c0_42, %c0_43] : memref<1x8x8x128xf32, #tpu.memory_space<vmem>>, vector<1x1x8x128xf32>
    %61 = vector.shape_cast %60 : vector<1x1x8x128xf32> to vector<8x128xf32>
    %c0_44 = arith.constant 0 : index
    %c1_45 = arith.constant 1 : index
    %c0_46 = arith.constant 0 : index
    %c0_47 = arith.constant 0 : index
    %62 = vector.load %arg2[%c0_44, %c1_45, %c0_46, %c0_47] : memref<1x8x8x128xf32, #tpu.memory_space<vmem>>, vector<1x1x8x128xf32>
    %63 = vector.shape_cast %62 : vector<1x1x8x128xf32> to vector<8x128xf32>
    %c0_48 = arith.constant 0 : index
    %c2_49 = arith.constant 2 : index
    %c0_50 = arith.constant 0 : index
    %c0_51 = arith.constant 0 : index
    %64 = vector.load %arg2[%c0_48, %c2_49, %c0_50, %c0_51] : memref<1x8x8x128xf32, #tpu.memory_space<vmem>>, vector<1x1x8x128xf32>
    %65 = vector.shape_cast %64 : vector<1x1x8x128xf32> to vector<8x128xf32>
    %66 = vector.broadcast %3 : vector<1x128xf32> to vector<8x128xf32>
    %67 = arith.mulf %61, %66 : vector<8x128xf32>
    %68 = vector.broadcast %9 : vector<1x128xf32> to vector<8x128xf32>
    %69 = arith.mulf %63, %68 : vector<8x128xf32>
    %70 = arith.addf %67, %69 : vector<8x128xf32>
    %71 = vector.broadcast %15 : vector<1x128xf32> to vector<8x128xf32>
    %72 = arith.mulf %65, %71 : vector<8x128xf32>
    %73 = arith.addf %70, %72 : vector<8x128xf32>
    %74 = vector.broadcast %1 : vector<1x128xf32> to vector<8x128xf32>
    %75 = arith.mulf %61, %74 : vector<8x128xf32>
    %76 = vector.broadcast %7 : vector<1x128xf32> to vector<8x128xf32>
    %77 = arith.mulf %63, %76 : vector<8x128xf32>
    %78 = arith.addf %75, %77 : vector<8x128xf32>
    %79 = vector.broadcast %13 : vector<1x128xf32> to vector<8x128xf32>
    %80 = arith.mulf %65, %79 : vector<8x128xf32>
    %81 = arith.addf %78, %80 : vector<8x128xf32>
    %c1_i32_52 = arith.constant 1 : i32
    %82 = tpu.dynamic_rotate %81 by %c1_i32_52 dim 0 : vector<8x128xf32>, i32 -> vector<8x128xf32>
    %cst_53 = arith.constant 0.000000e+00 : f32
    %83 = vector.shape_cast %21 : vector<8x1xi1> to vector<8x1xi1>
    %84 = vector.broadcast %83 : vector<8x1xi1> to vector<8x128xi1>
    %85 = vector.broadcast %cst_53 : f32 to vector<8x128xf32>
    %86 = arith.select %84, %82, %85 : vector<8x128xi1>, vector<8x128xf32>
    %87 = arith.addf %73, %86 : vector<8x128xf32>
    %88 = vector.broadcast %5 : vector<1x128xf32> to vector<8x128xf32>
    %89 = arith.mulf %61, %88 : vector<8x128xf32>
    %90 = vector.broadcast %11 : vector<1x128xf32> to vector<8x128xf32>
    %91 = arith.mulf %63, %90 : vector<8x128xf32>
    %92 = arith.addf %89, %91 : vector<8x128xf32>
    %93 = vector.broadcast %17 : vector<1x128xf32> to vector<8x128xf32>
    %94 = arith.mulf %65, %93 : vector<8x128xf32>
    %95 = arith.addf %92, %94 : vector<8x128xf32>
    %c7_i32_54 = arith.constant 7 : i32
    %96 = tpu.dynamic_rotate %95 by %c7_i32_54 dim 0 : vector<8x128xf32>, i32 -> vector<8x128xf32>
    %cst_55 = arith.constant 0.000000e+00 : f32
    %97 = vector.shape_cast %23 : vector<8x1xi1> to vector<8x1xi1>
    %98 = vector.broadcast %97 : vector<8x1xi1> to vector<8x128xi1>
    %99 = vector.broadcast %cst_55 : f32 to vector<8x128xf32>
    %100 = arith.select %98, %96, %99 : vector<8x128xi1>, vector<8x128xf32>
    %101 = arith.addf %87, %100 : vector<8x128xf32>
    %102 = vector.broadcast %18 : vector<1x128xf32> to vector<8x128xf32>
    %103 = arith.addf %101, %102 : vector<8x128xf32>
    %c0_56 = arith.constant 0 : index
    %c1_57 = arith.constant 1 : index
    %c0_58 = arith.constant 0 : index
    %c0_59 = arith.constant 0 : index
    %104 = vector.load %arg5[%c0_56, %c1_57, %c0_58, %c0_59] : memref<1x8x8x128xf32, #tpu.memory_space<vmem>>, vector<1x1x8x128xf32>
    %105 = vector.shape_cast %104 : vector<1x1x8x128xf32> to vector<8x128xf32>
    %106 = vector.shape_cast %103 : vector<8x128xf32> to vector<1x1x8x128xf32>
    tpu.vector_store %arg5[%c0_56, %c1_57, %c0_58, %c0_59], %106 {strides = array<i32>} : memref<1x8x8x128xf32, #tpu.memory_space<vmem>>, vector<1x1x8x128xf32>,
    %c0_60 = arith.constant 0 : index
    %c1_61 = arith.constant 1 : index
    %c0_62 = arith.constant 0 : index
    %c0_63 = arith.constant 0 : index
    %107 = vector.load %arg2[%c0_60, %c1_61, %c0_62, %c0_63] : memref<1x8x8x128xf32, #tpu.memory_space<vmem>>, vector<1x1x8x128xf32>
    %108 = vector.shape_cast %107 : vector<1x1x8x128xf32> to vector<8x128xf32>
    %c0_64 = arith.constant 0 : index
    %c2_65 = arith.constant 2 : index
    %c0_66 = arith.constant 0 : index
    %c0_67 = arith.constant 0 : index
    %109 = vector.load %arg2[%c0_64, %c2_65, %c0_66, %c0_67] : memref<1x8x8x128xf32, #tpu.memory_space<vmem>>, vector<1x1x8x128xf32>
    %110 = vector.shape_cast %109 : vector<1x1x8x128xf32> to vector<8x128xf32>
    %c0_68 = arith.constant 0 : index
    %c3 = arith.constant 3 : index
    %c0_69 = arith.constant 0 : index
    %c0_70 = arith.constant 0 : index
    %111 = vector.load %arg2[%c0_68, %c3, %c0_69, %c0_70] : memref<1x8x8x128xf32, #tpu.memory_space<vmem>>, vector<1x1x8x128xf32>
    %112 = vector.shape_cast %111 : vector<1x1x8x128xf32> to vector<8x128xf32>
    %113 = vector.broadcast %3 : vector<1x128xf32> to vector<8x128xf32>
    %114 = arith.mulf %108, %113 : vector<8x128xf32>
    %115 = vector.broadcast %9 : vector<1x128xf32> to vector<8x128xf32>
    %116 = arith.mulf %110, %115 : vector<8x128xf32>
    %117 = arith.addf %114, %116 : vector<8x128xf32>
    %118 = vector.broadcast %15 : vector<1x128xf32> to vector<8x128xf32>
    %119 = arith.mulf %112, %118 : vector<8x128xf32>
    %120 = arith.addf %117, %119 : vector<8x128xf32>
    %121 = vector.broadcast %1 : vector<1x128xf32> to vector<8x128xf32>
    %122 = arith.mulf %108, %121 : vector<8x128xf32>
    %123 = vector.broadcast %7 : vector<1x128xf32> to vector<8x128xf32>
    %124 = arith.mulf %110, %123 : vector<8x128xf32>
    %125 = arith.addf %122, %124 : vector<8x128xf32>
    %126 = vector.broadcast %13 : vector<1x128xf32> to vector<8x128xf32>
    %127 = arith.mulf %112, %126 : vector<8x128xf32>
    %128 = arith.addf %125, %127 : vector<8x128xf32>
    %c1_i32_71 = arith.constant 1 : i32
    %129 = tpu.dynamic_rotate %128 by %c1_i32_71 dim 0 : vector<8x128xf32>, i32 -> vector<8x128xf32>
    %cst_72 = arith.constant 0.000000e+00 : f32
    %130 = vector.shape_cast %21 : vector<8x1xi1> to vector<8x1xi1>
    %131 = vector.broadcast %130 : vector<8x1xi1> to vector<8x128xi1>
    %132 = vector.broadcast %cst_72 : f32 to vector<8x128xf32>
    %133 = arith.select %131, %129, %132 : vector<8x128xi1>, vector<8x128xf32>
    %134 = arith.addf %120, %133 : vector<8x128xf32>
    %135 = vector.broadcast %5 : vector<1x128xf32> to vector<8x128xf32>
    %136 = arith.mulf %108, %135 : vector<8x128xf32>
    %137 = vector.broadcast %11 : vector<1x128xf32> to vector<8x128xf32>
    %138 = arith.mulf %110, %137 : vector<8x128xf32>
    %139 = arith.addf %136, %138 : vector<8x128xf32>
    %140 = vector.broadcast %17 : vector<1x128xf32> to vector<8x128xf32>
    %141 = arith.mulf %112, %140 : vector<8x128xf32>
    %142 = arith.addf %139, %141 : vector<8x128xf32>
    %c7_i32_73 = arith.constant 7 : i32
    %143 = tpu.dynamic_rotate %142 by %c7_i32_73 dim 0 : vector<8x128xf32>, i32 -> vector<8x128xf32>
    %cst_74 = arith.constant 0.000000e+00 : f32
    %144 = vector.shape_cast %23 : vector<8x1xi1> to vector<8x1xi1>
    %145 = vector.broadcast %144 : vector<8x1xi1> to vector<8x128xi1>
    %146 = vector.broadcast %cst_74 : f32 to vector<8x128xf32>
    %147 = arith.select %145, %143, %146 : vector<8x128xi1>, vector<8x128xf32>
    %148 = arith.addf %134, %147 : vector<8x128xf32>
    %149 = vector.broadcast %18 : vector<1x128xf32> to vector<8x128xf32>
    %150 = arith.addf %148, %149 : vector<8x128xf32>
    %c0_75 = arith.constant 0 : index
    %c2_76 = arith.constant 2 : index
    %c0_77 = arith.constant 0 : index
    %c0_78 = arith.constant 0 : index
    %151 = vector.load %arg5[%c0_75, %c2_76, %c0_77, %c0_78] : memref<1x8x8x128xf32, #tpu.memory_space<vmem>>, vector<1x1x8x128xf32>
    %152 = vector.shape_cast %151 : vector<1x1x8x128xf32> to vector<8x128xf32>
    %153 = vector.shape_cast %150 : vector<8x128xf32> to vector<1x1x8x128xf32>
    tpu.vector_store %arg5[%c0_75, %c2_76, %c0_77, %c0_78], %153 {strides = array<i32>} : memref<1x8x8x128xf32, #tpu.memory_space<vmem>>, vector<1x1x8x128xf32>,
    %c0_79 = arith.constant 0 : index
    %c2_80 = arith.constant 2 : index
    %c0_81 = arith.constant 0 : index
    %c0_82 = arith.constant 0 : index
    %154 = vector.load %arg2[%c0_79, %c2_80, %c0_81, %c0_82] : memref<1x8x8x128xf32, #tpu.memory_space<vmem>>, vector<1x1x8x128xf32>
    %155 = vector.shape_cast %154 : vector<1x1x8x128xf32> to vector<8x128xf32>
    %c0_83 = arith.constant 0 : index
    %c3_84 = arith.constant 3 : index
    %c0_85 = arith.constant 0 : index
    %c0_86 = arith.constant 0 : index
    %156 = vector.load %arg2[%c0_83, %c3_84, %c0_85, %c0_86] : memref<1x8x8x128xf32, #tpu.memory_space<vmem>>, vector<1x1x8x128xf32>
    %157 = vector.shape_cast %156 : vector<1x1x8x128xf32> to vector<8x128xf32>
    %c0_87 = arith.constant 0 : index
    %c4 = arith.constant 4 : index
    %c0_88 = arith.constant 0 : index
    %c0_89 = arith.constant 0 : index
    %158 = vector.load %arg2[%c0_87, %c4, %c0_88, %c0_89] : memref<1x8x8x128xf32, #tpu.memory_space<vmem>>, vector<1x1x8x128xf32>
    %159 = vector.shape_cast %158 : vector<1x1x8x128xf32> to vector<8x128xf32>
    %160 = vector.broadcast %3 : vector<1x128xf32> to vector<8x128xf32>
    %161 = arith.mulf %155, %160 : vector<8x128xf32>
    %162 = vector.broadcast %9 : vector<1x128xf32> to vector<8x128xf32>
    %163 = arith.mulf %157, %162 : vector<8x128xf32>
    %164 = arith.addf %161, %163 : vector<8x128xf32>
    %165 = vector.broadcast %15 : vector<1x128xf32> to vector<8x128xf32>
    %166 = arith.mulf %159, %165 : vector<8x128xf32>
    %167 = arith.addf %164, %166 : vector<8x128xf32>
    %168 = vector.broadcast %1 : vector<1x128xf32> to vector<8x128xf32>
    %169 = arith.mulf %155, %168 : vector<8x128xf32>
    %170 = vector.broadcast %7 : vector<1x128xf32> to vector<8x128xf32>
    %171 = arith.mulf %157, %170 : vector<8x128xf32>
    %172 = arith.addf %169, %171 : vector<8x128xf32>
    %173 = vector.broadcast %13 : vector<1x128xf32> to vector<8x128xf32>
    %174 = arith.mulf %159, %173 : vector<8x128xf32>
    %175 = arith.addf %172, %174 : vector<8x128xf32>
    %c1_i32_90 = arith.constant 1 : i32
    %176 = tpu.dynamic_rotate %175 by %c1_i32_90 dim 0 : vector<8x128xf32>, i32 -> vector<8x128xf32>
    %cst_91 = arith.constant 0.000000e+00 : f32
    %177 = vector.shape_cast %21 : vector<8x1xi1> to vector<8x1xi1>
    %178 = vector.broadcast %177 : vector<8x1xi1> to vector<8x128xi1>
    %179 = vector.broadcast %cst_91 : f32 to vector<8x128xf32>
    %180 = arith.select %178, %176, %179 : vector<8x128xi1>, vector<8x128xf32>
    %181 = arith.addf %167, %180 : vector<8x128xf32>
    %182 = vector.broadcast %5 : vector<1x128xf32> to vector<8x128xf32>
    %183 = arith.mulf %155, %182 : vector<8x128xf32>
    %184 = vector.broadcast %11 : vector<1x128xf32> to vector<8x128xf32>
    %185 = arith.mulf %157, %184 : vector<8x128xf32>
    %186 = arith.addf %183, %185 : vector<8x128xf32>
    %187 = vector.broadcast %17 : vector<1x128xf32> to vector<8x128xf32>
    %188 = arith.mulf %159, %187 : vector<8x128xf32>
    %189 = arith.addf %186, %188 : vector<8x128xf32>
    %c7_i32_92 = arith.constant 7 : i32
    %190 = tpu.dynamic_rotate %189 by %c7_i32_92 dim 0 : vector<8x128xf32>, i32 -> vector<8x128xf32>
    %cst_93 = arith.constant 0.000000e+00 : f32
    %191 = vector.shape_cast %23 : vector<8x1xi1> to vector<8x1xi1>
    %192 = vector.broadcast %191 : vector<8x1xi1> to vector<8x128xi1>
    %193 = vector.broadcast %cst_93 : f32 to vector<8x128xf32>
    %194 = arith.select %192, %190, %193 : vector<8x128xi1>, vector<8x128xf32>
    %195 = arith.addf %181, %194 : vector<8x128xf32>
    %196 = vector.broadcast %18 : vector<1x128xf32> to vector<8x128xf32>
    %197 = arith.addf %195, %196 : vector<8x128xf32>
    %c0_94 = arith.constant 0 : index
    %c3_95 = arith.constant 3 : index
    %c0_96 = arith.constant 0 : index
    %c0_97 = arith.constant 0 : index
    %198 = vector.load %arg5[%c0_94, %c3_95, %c0_96, %c0_97] : memref<1x8x8x128xf32, #tpu.memory_space<vmem>>, vector<1x1x8x128xf32>
    %199 = vector.shape_cast %198 : vector<1x1x8x128xf32> to vector<8x128xf32>
    %200 = vector.shape_cast %197 : vector<8x128xf32> to vector<1x1x8x128xf32>
    tpu.vector_store %arg5[%c0_94, %c3_95, %c0_96, %c0_97], %200 {strides = array<i32>} : memref<1x8x8x128xf32, #tpu.memory_space<vmem>>, vector<1x1x8x128xf32>,
    %c0_98 = arith.constant 0 : index
    %c3_99 = arith.constant 3 : index
    %c0_100 = arith.constant 0 : index
    %c0_101 = arith.constant 0 : index
    %201 = vector.load %arg2[%c0_98, %c3_99, %c0_100, %c0_101] : memref<1x8x8x128xf32, #tpu.memory_space<vmem>>, vector<1x1x8x128xf32>
    %202 = vector.shape_cast %201 : vector<1x1x8x128xf32> to vector<8x128xf32>
    %c0_102 = arith.constant 0 : index
    %c4_103 = arith.constant 4 : index
    %c0_104 = arith.constant 0 : index
    %c0_105 = arith.constant 0 : index
    %203 = vector.load %arg2[%c0_102, %c4_103, %c0_104, %c0_105] : memref<1x8x8x128xf32, #tpu.memory_space<vmem>>, vector<1x1x8x128xf32>
    %204 = vector.shape_cast %203 : vector<1x1x8x128xf32> to vector<8x128xf32>
    %c0_106 = arith.constant 0 : index
    %c5 = arith.constant 5 : index
    %c0_107 = arith.constant 0 : index
    %c0_108 = arith.constant 0 : index
    %205 = vector.load %arg2[%c0_106, %c5, %c0_107, %c0_108] : memref<1x8x8x128xf32, #tpu.memory_space<vmem>>, vector<1x1x8x128xf32>
    %206 = vector.shape_cast %205 : vector<1x1x8x128xf32> to vector<8x128xf32>
    %207 = vector.broadcast %3 : vector<1x128xf32> to vector<8x128xf32>
    %208 = arith.mulf %202, %207 : vector<8x128xf32>
    %209 = vector.broadcast %9 : vector<1x128xf32> to vector<8x128xf32>
    %210 = arith.mulf %204, %209 : vector<8x128xf32>
    %211 = arith.addf %208, %210 : vector<8x128xf32>
    %212 = vector.broadcast %15 : vector<1x128xf32> to vector<8x128xf32>
    %213 = arith.mulf %206, %212 : vector<8x128xf32>
    %214 = arith.addf %211, %213 : vector<8x128xf32>
    %215 = vector.broadcast %1 : vector<1x128xf32> to vector<8x128xf32>
    %216 = arith.mulf %202, %215 : vector<8x128xf32>
    %217 = vector.broadcast %7 : vector<1x128xf32> to vector<8x128xf32>
    %218 = arith.mulf %204, %217 : vector<8x128xf32>
    %219 = arith.addf %216, %218 : vector<8x128xf32>
    %220 = vector.broadcast %13 : vector<1x128xf32> to vector<8x128xf32>
    %221 = arith.mulf %206, %220 : vector<8x128xf32>
    %222 = arith.addf %219, %221 : vector<8x128xf32>
    %c1_i32_109 = arith.constant 1 : i32
    %223 = tpu.dynamic_rotate %222 by %c1_i32_109 dim 0 : vector<8x128xf32>, i32 -> vector<8x128xf32>
    %cst_110 = arith.constant 0.000000e+00 : f32
    %224 = vector.shape_cast %21 : vector<8x1xi1> to vector<8x1xi1>
    %225 = vector.broadcast %224 : vector<8x1xi1> to vector<8x128xi1>
    %226 = vector.broadcast %cst_110 : f32 to vector<8x128xf32>
    %227 = arith.select %225, %223, %226 : vector<8x128xi1>, vector<8x128xf32>
    %228 = arith.addf %214, %227 : vector<8x128xf32>
    %229 = vector.broadcast %5 : vector<1x128xf32> to vector<8x128xf32>
    %230 = arith.mulf %202, %229 : vector<8x128xf32>
    %231 = vector.broadcast %11 : vector<1x128xf32> to vector<8x128xf32>
    %232 = arith.mulf %204, %231 : vector<8x128xf32>
    %233 = arith.addf %230, %232 : vector<8x128xf32>
    %234 = vector.broadcast %17 : vector<1x128xf32> to vector<8x128xf32>
    %235 = arith.mulf %206, %234 : vector<8x128xf32>
    %236 = arith.addf %233, %235 : vector<8x128xf32>
    %c7_i32_111 = arith.constant 7 : i32
    %237 = tpu.dynamic_rotate %236 by %c7_i32_111 dim 0 : vector<8x128xf32>, i32 -> vector<8x128xf32>
    %cst_112 = arith.constant 0.000000e+00 : f32
    %238 = vector.shape_cast %23 : vector<8x1xi1> to vector<8x1xi1>
    %239 = vector.broadcast %238 : vector<8x1xi1> to vector<8x128xi1>
    %240 = vector.broadcast %cst_112 : f32 to vector<8x128xf32>
    %241 = arith.select %239, %237, %240 : vector<8x128xi1>, vector<8x128xf32>
    %242 = arith.addf %228, %241 : vector<8x128xf32>
    %243 = vector.broadcast %18 : vector<1x128xf32> to vector<8x128xf32>
    %244 = arith.addf %242, %243 : vector<8x128xf32>
    %c0_113 = arith.constant 0 : index
    %c4_114 = arith.constant 4 : index
    %c0_115 = arith.constant 0 : index
    %c0_116 = arith.constant 0 : index
    %245 = vector.load %arg5[%c0_113, %c4_114, %c0_115, %c0_116] : memref<1x8x8x128xf32, #tpu.memory_space<vmem>>, vector<1x1x8x128xf32>
    %246 = vector.shape_cast %245 : vector<1x1x8x128xf32> to vector<8x128xf32>
    %247 = vector.shape_cast %244 : vector<8x128xf32> to vector<1x1x8x128xf32>
    tpu.vector_store %arg5[%c0_113, %c4_114, %c0_115, %c0_116], %247 {strides = array<i32>} : memref<1x8x8x128xf32, #tpu.memory_space<vmem>>, vector<1x1x8x128xf32>,
    %c0_117 = arith.constant 0 : index
    %c4_118 = arith.constant 4 : index
    %c0_119 = arith.constant 0 : index
    %c0_120 = arith.constant 0 : index
    %248 = vector.load %arg2[%c0_117, %c4_118, %c0_119, %c0_120] : memref<1x8x8x128xf32, #tpu.memory_space<vmem>>, vector<1x1x8x128xf32>
    %249 = vector.shape_cast %248 : vector<1x1x8x128xf32> to vector<8x128xf32>
    %c0_121 = arith.constant 0 : index
    %c5_122 = arith.constant 5 : index
    %c0_123 = arith.constant 0 : index
    %c0_124 = arith.constant 0 : index
    %250 = vector.load %arg2[%c0_121, %c5_122, %c0_123, %c0_124] : memref<1x8x8x128xf32, #tpu.memory_space<vmem>>, vector<1x1x8x128xf32>
    %251 = vector.shape_cast %250 : vector<1x1x8x128xf32> to vector<8x128xf32>
    %c0_125 = arith.constant 0 : index
    %c6 = arith.constant 6 : index
    %c0_126 = arith.constant 0 : index
    %c0_127 = arith.constant 0 : index
    %252 = vector.load %arg2[%c0_125, %c6, %c0_126, %c0_127] : memref<1x8x8x128xf32, #tpu.memory_space<vmem>>, vector<1x1x8x128xf32>
    %253 = vector.shape_cast %252 : vector<1x1x8x128xf32> to vector<8x128xf32>
    %254 = vector.broadcast %3 : vector<1x128xf32> to vector<8x128xf32>
    %255 = arith.mulf %249, %254 : vector<8x128xf32>
    %256 = vector.broadcast %9 : vector<1x128xf32> to vector<8x128xf32>
    %257 = arith.mulf %251, %256 : vector<8x128xf32>
    %258 = arith.addf %255, %257 : vector<8x128xf32>
    %259 = vector.broadcast %15 : vector<1x128xf32> to vector<8x128xf32>
    %260 = arith.mulf %253, %259 : vector<8x128xf32>
    %261 = arith.addf %258, %260 : vector<8x128xf32>
    %262 = vector.broadcast %1 : vector<1x128xf32> to vector<8x128xf32>
    %263 = arith.mulf %249, %262 : vector<8x128xf32>
    %264 = vector.broadcast %7 : vector<1x128xf32> to vector<8x128xf32>
    %265 = arith.mulf %251, %264 : vector<8x128xf32>
    %266 = arith.addf %263, %265 : vector<8x128xf32>
    %267 = vector.broadcast %13 : vector<1x128xf32> to vector<8x128xf32>
    %268 = arith.mulf %253, %267 : vector<8x128xf32>
    %269 = arith.addf %266, %268 : vector<8x128xf32>
    %c1_i32_128 = arith.constant 1 : i32
    %270 = tpu.dynamic_rotate %269 by %c1_i32_128 dim 0 : vector<8x128xf32>, i32 -> vector<8x128xf32>
    %cst_129 = arith.constant 0.000000e+00 : f32
    %271 = vector.shape_cast %21 : vector<8x1xi1> to vector<8x1xi1>
    %272 = vector.broadcast %271 : vector<8x1xi1> to vector<8x128xi1>
    %273 = vector.broadcast %cst_129 : f32 to vector<8x128xf32>
    %274 = arith.select %272, %270, %273 : vector<8x128xi1>, vector<8x128xf32>
    %275 = arith.addf %261, %274 : vector<8x128xf32>
    %276 = vector.broadcast %5 : vector<1x128xf32> to vector<8x128xf32>
    %277 = arith.mulf %249, %276 : vector<8x128xf32>
    %278 = vector.broadcast %11 : vector<1x128xf32> to vector<8x128xf32>
    %279 = arith.mulf %251, %278 : vector<8x128xf32>
    %280 = arith.addf %277, %279 : vector<8x128xf32>
    %281 = vector.broadcast %17 : vector<1x128xf32> to vector<8x128xf32>
    %282 = arith.mulf %253, %281 : vector<8x128xf32>
    %283 = arith.addf %280, %282 : vector<8x128xf32>
    %c7_i32_130 = arith.constant 7 : i32
    %284 = tpu.dynamic_rotate %283 by %c7_i32_130 dim 0 : vector<8x128xf32>, i32 -> vector<8x128xf32>
    %cst_131 = arith.constant 0.000000e+00 : f32
    %285 = vector.shape_cast %23 : vector<8x1xi1> to vector<8x1xi1>
    %286 = vector.broadcast %285 : vector<8x1xi1> to vector<8x128xi1>
    %287 = vector.broadcast %cst_131 : f32 to vector<8x128xf32>
    %288 = arith.select %286, %284, %287 : vector<8x128xi1>, vector<8x128xf32>
    %289 = arith.addf %275, %288 : vector<8x128xf32>
    %290 = vector.broadcast %18 : vector<1x128xf32> to vector<8x128xf32>
    %291 = arith.addf %289, %290 : vector<8x128xf32>
    %c0_132 = arith.constant 0 : index
    %c5_133 = arith.constant 5 : index
    %c0_134 = arith.constant 0 : index
    %c0_135 = arith.constant 0 : index
    %292 = vector.load %arg5[%c0_132, %c5_133, %c0_134, %c0_135] : memref<1x8x8x128xf32, #tpu.memory_space<vmem>>, vector<1x1x8x128xf32>
    %293 = vector.shape_cast %292 : vector<1x1x8x128xf32> to vector<8x128xf32>
    %294 = vector.shape_cast %291 : vector<8x128xf32> to vector<1x1x8x128xf32>
    tpu.vector_store %arg5[%c0_132, %c5_133, %c0_134, %c0_135], %294 {strides = array<i32>} : memref<1x8x8x128xf32, #tpu.memory_space<vmem>>, vector<1x1x8x128xf32>,
    %c0_136 = arith.constant 0 : index
    %c5_137 = arith.constant 5 : index
    %c0_138 = arith.constant 0 : index
    %c0_139 = arith.constant 0 : index
    %295 = vector.load %arg2[%c0_136, %c5_137, %c0_138, %c0_139] : memref<1x8x8x128xf32, #tpu.memory_space<vmem>>, vector<1x1x8x128xf32>
    %296 = vector.shape_cast %295 : vector<1x1x8x128xf32> to vector<8x128xf32>
    %c0_140 = arith.constant 0 : index
    %c6_141 = arith.constant 6 : index
    %c0_142 = arith.constant 0 : index
    %c0_143 = arith.constant 0 : index
    %297 = vector.load %arg2[%c0_140, %c6_141, %c0_142, %c0_143] : memref<1x8x8x128xf32, #tpu.memory_space<vmem>>, vector<1x1x8x128xf32>
    %298 = vector.shape_cast %297 : vector<1x1x8x128xf32> to vector<8x128xf32>
    %c0_144 = arith.constant 0 : index
    %c7 = arith.constant 7 : index
    %c0_145 = arith.constant 0 : index
    %c0_146 = arith.constant 0 : index
    %299 = vector.load %arg2[%c0_144, %c7, %c0_145, %c0_146] : memref<1x8x8x128xf32, #tpu.memory_space<vmem>>, vector<1x1x8x128xf32>
    %300 = vector.shape_cast %299 : vector<1x1x8x128xf32> to vector<8x128xf32>
    %301 = vector.broadcast %3 : vector<1x128xf32> to vector<8x128xf32>
    %302 = arith.mulf %296, %301 : vector<8x128xf32>
    %303 = vector.broadcast %9 : vector<1x128xf32> to vector<8x128xf32>
    %304 = arith.mulf %298, %303 : vector<8x128xf32>
    %305 = arith.addf %302, %304 : vector<8x128xf32>
    %306 = vector.broadcast %15 : vector<1x128xf32> to vector<8x128xf32>
    %307 = arith.mulf %300, %306 : vector<8x128xf32>
    %308 = arith.addf %305, %307 : vector<8x128xf32>
    %309 = vector.broadcast %1 : vector<1x128xf32> to vector<8x128xf32>
    %310 = arith.mulf %296, %309 : vector<8x128xf32>
    %311 = vector.broadcast %7 : vector<1x128xf32> to vector<8x128xf32>
    %312 = arith.mulf %298, %311 : vector<8x128xf32>
    %313 = arith.addf %310, %312 : vector<8x128xf32>
    %314 = vector.broadcast %13 : vector<1x128xf32> to vector<8x128xf32>
    %315 = arith.mulf %300, %314 : vector<8x128xf32>
    %316 = arith.addf %313, %315 : vector<8x128xf32>
    %c1_i32_147 = arith.constant 1 : i32
    %317 = tpu.dynamic_rotate %316 by %c1_i32_147 dim 0 : vector<8x128xf32>, i32 -> vector<8x128xf32>
    %cst_148 = arith.constant 0.000000e+00 : f32
    %318 = vector.shape_cast %21 : vector<8x1xi1> to vector<8x1xi1>
    %319 = vector.broadcast %318 : vector<8x1xi1> to vector<8x128xi1>
    %320 = vector.broadcast %cst_148 : f32 to vector<8x128xf32>
    %321 = arith.select %319, %317, %320 : vector<8x128xi1>, vector<8x128xf32>
    %322 = arith.addf %308, %321 : vector<8x128xf32>
    %323 = vector.broadcast %5 : vector<1x128xf32> to vector<8x128xf32>
    %324 = arith.mulf %296, %323 : vector<8x128xf32>
    %325 = vector.broadcast %11 : vector<1x128xf32> to vector<8x128xf32>
    %326 = arith.mulf %298, %325 : vector<8x128xf32>
    %327 = arith.addf %324, %326 : vector<8x128xf32>
    %328 = vector.broadcast %17 : vector<1x128xf32> to vector<8x128xf32>
    %329 = arith.mulf %300, %328 : vector<8x128xf32>
    %330 = arith.addf %327, %329 : vector<8x128xf32>
    %c7_i32_149 = arith.constant 7 : i32
    %331 = tpu.dynamic_rotate %330 by %c7_i32_149 dim 0 : vector<8x128xf32>, i32 -> vector<8x128xf32>
    %cst_150 = arith.constant 0.000000e+00 : f32
    %332 = vector.shape_cast %23 : vector<8x1xi1> to vector<8x1xi1>
    %333 = vector.broadcast %332 : vector<8x1xi1> to vector<8x128xi1>
    %334 = vector.broadcast %cst_150 : f32 to vector<8x128xf32>
    %335 = arith.select %333, %331, %334 : vector<8x128xi1>, vector<8x128xf32>
    %336 = arith.addf %322, %335 : vector<8x128xf32>
    %337 = vector.broadcast %18 : vector<1x128xf32> to vector<8x128xf32>
    %338 = arith.addf %336, %337 : vector<8x128xf32>
    %c0_151 = arith.constant 0 : index
    %c6_152 = arith.constant 6 : index
    %c0_153 = arith.constant 0 : index
    %c0_154 = arith.constant 0 : index
    %339 = vector.load %arg5[%c0_151, %c6_152, %c0_153, %c0_154] : memref<1x8x8x128xf32, #tpu.memory_space<vmem>>, vector<1x1x8x128xf32>
    %340 = vector.shape_cast %339 : vector<1x1x8x128xf32> to vector<8x128xf32>
    %341 = vector.shape_cast %338 : vector<8x128xf32> to vector<1x1x8x128xf32>
    tpu.vector_store %arg5[%c0_151, %c6_152, %c0_153, %c0_154], %341 {strides = array<i32>} : memref<1x8x8x128xf32, #tpu.memory_space<vmem>>, vector<1x1x8x128xf32>,
    %c0_155 = arith.constant 0 : index
    %c6_156 = arith.constant 6 : index
    %c0_157 = arith.constant 0 : index
    %c0_158 = arith.constant 0 : index
    %342 = vector.load %arg2[%c0_155, %c6_156, %c0_157, %c0_158] : memref<1x8x8x128xf32, #tpu.memory_space<vmem>>, vector<1x1x8x128xf32>
    %343 = vector.shape_cast %342 : vector<1x1x8x128xf32> to vector<8x128xf32>
    %c0_159 = arith.constant 0 : index
    %c7_160 = arith.constant 7 : index
    %c0_161 = arith.constant 0 : index
    %c0_162 = arith.constant 0 : index
    %344 = vector.load %arg2[%c0_159, %c7_160, %c0_161, %c0_162] : memref<1x8x8x128xf32, #tpu.memory_space<vmem>>, vector<1x1x8x128xf32>
    %345 = vector.shape_cast %344 : vector<1x1x8x128xf32> to vector<8x128xf32>
    %346 = vector.broadcast %3 : vector<1x128xf32> to vector<8x128xf32>
    %347 = arith.mulf %343, %346 : vector<8x128xf32>
    %348 = vector.broadcast %9 : vector<1x128xf32> to vector<8x128xf32>
    %349 = arith.mulf %345, %348 : vector<8x128xf32>
    %350 = arith.addf %347, %349 : vector<8x128xf32>
    %351 = vector.broadcast %1 : vector<1x128xf32> to vector<8x128xf32>
    %352 = arith.mulf %343, %351 : vector<8x128xf32>
    %353 = vector.broadcast %7 : vector<1x128xf32> to vector<8x128xf32>
    %354 = arith.mulf %345, %353 : vector<8x128xf32>
    %355 = arith.addf %352, %354 : vector<8x128xf32>
    %c1_i32_163 = arith.constant 1 : i32
    %356 = tpu.dynamic_rotate %355 by %c1_i32_163 dim 0 : vector<8x128xf32>, i32 -> vector<8x128xf32>
    %cst_164 = arith.constant 0.000000e+00 : f32
    %357 = vector.shape_cast %21 : vector<8x1xi1> to vector<8x1xi1>
    %358 = vector.broadcast %357 : vector<8x1xi1> to vector<8x128xi1>
    %359 = vector.broadcast %cst_164 : f32 to vector<8x128xf32>
    %360 = arith.select %358, %356, %359 : vector<8x128xi1>, vector<8x128xf32>
    %361 = arith.addf %350, %360 : vector<8x128xf32>
    %362 = vector.broadcast %5 : vector<1x128xf32> to vector<8x128xf32>
    %363 = arith.mulf %343, %362 : vector<8x128xf32>
    %364 = vector.broadcast %11 : vector<1x128xf32> to vector<8x128xf32>
    %365 = arith.mulf %345, %364 : vector<8x128xf32>
    %366 = arith.addf %363, %365 : vector<8x128xf32>
    %c7_i32_165 = arith.constant 7 : i32
    %367 = tpu.dynamic_rotate %366 by %c7_i32_165 dim 0 : vector<8x128xf32>, i32 -> vector<8x128xf32>
    %cst_166 = arith.constant 0.000000e+00 : f32
    %368 = vector.shape_cast %23 : vector<8x1xi1> to vector<8x1xi1>
    %369 = vector.broadcast %368 : vector<8x1xi1> to vector<8x128xi1>
    %370 = vector.broadcast %cst_166 : f32 to vector<8x128xf32>
    %371 = arith.select %369, %367, %370 : vector<8x128xi1>, vector<8x128xf32>
    %372 = arith.addf %361, %371 : vector<8x128xf32>
    %373 = vector.broadcast %18 : vector<1x128xf32> to vector<8x128xf32>
    %374 = arith.addf %372, %373 : vector<8x128xf32>
    %c0_167 = arith.constant 0 : index
    %c7_168 = arith.constant 7 : index
    %c0_169 = arith.constant 0 : index
    %c0_170 = arith.constant 0 : index
    %375 = vector.load %arg5[%c0_167, %c7_168, %c0_169, %c0_170] : memref<1x8x8x128xf32, #tpu.memory_space<vmem>>, vector<1x1x8x128xf32>
    %376 = vector.shape_cast %375 : vector<1x1x8x128xf32> to vector<8x128xf32>
    %377 = vector.shape_cast %374 : vector<8x128xf32> to vector<1x1x8x128xf32>
    tpu.vector_store %arg5[%c0_167, %c7_168, %c0_169, %c0_170], %377 {strides = array<i32>} : memref<1x8x8x128xf32, #tpu.memory_space<vmem>>, vector<1x1x8x128xf32>,
    return
  }
  func.func @transform_0(%arg0: i32, %arg1: i32) -> (i32, i32, i32, i32) {
    %c0_i32 = arith.constant 0 : i32
    %c0_i32_0 = arith.constant 0 : i32
    %c0_i32_1 = arith.constant 0 : i32
    return %arg1, %c0_i32, %c0_i32_0, %arg0 : i32, i32, i32, i32
  }
  func.func @transform_1(%arg0: i32, %arg1: i32) -> (i32, i32, i32) {
    %c0_i32 = arith.constant 0 : i32
    %c0_i32_0 = arith.constant 0 : i32
    %c0_i32_1 = arith.constant 0 : i32
    return %c0_i32, %c0_i32_0, %arg0 : i32, i32, i32
  }
  func.func @transform_2(%arg0: i32, %arg1: i32) -> (i32, i32) {
    %c0_i32 = arith.constant 0 : i32
    %c0_i32_0 = arith.constant 0 : i32
    return %c0_i32, %arg0 : i32, i32
  }
  func.func @transform_3(%arg0: i32, %arg1: i32) -> (i32, i32, i32, i32) {
    %c0_i32 = arith.constant 0 : i32
    %c0_i32_0 = arith.constant 0 : i32
    %c0_i32_1 = arith.constant 0 : i32
    return %arg1, %c0_i32, %c0_i32_0, %arg0 : i32, i32, i32, i32
  }
}

</mosaic_0001>

<llo_original>
// kernel: tpu_custom_call.1
$region0: #{tpu_custom_call.1}
  #allocation0 [shape = 'u32[]', space=smem, size = 0x4, offset = 0x4, fixed_abs, tag = 'smem constant byte address 0x4 - core index']
  #allocation1 [shape = 'u32[144,128]{1,0:T(1,128)}', space=vmem, size = 0x12000, scoped, tag = 'internal scratch']
  %s0 = inlined_call_operand.hbm [shape: f32[2,8,8,128], index: 0, kind: input, shape index: {}]
  %s1 = inlined_call_operand.hbm [shape: f32[3,3,128], index: 1, kind: input, shape index: {}]
  %s2 = inlined_call_operand.vmem [shape: f32[1,128], index: 2, kind: input, shape index: {}]
  %s3 = inlined_call_operand.hbm [shape: f32[2,8,8,128], index: 3, kind: output, shape index: {}]
  %s4 = sld [smem:[#allocation0]]
  $region53: #{tpu_custom_call.1} parent=0
    _
  %s6 = ssub.s32 1, %s4
  %s7 = scalar_select 0, %s6, %s4
  $region1: #{tpu_custom_call.1} parent=0
    #allocation2 [shape = 'u8[65536]{0}', space=vmem, size = 0x10000, scoped, tag = 'input window, operand 0']
    #allocation3 [shape = 's32[2]{0}', space=sflag, size = 0x8, scoped, tag = 'scoped memory for tpu_custom_call.1']
    #allocation4 [shape = 's32[2]{0}', space=sflag, size = 0x8, scoped, tag = 'scoped memory for tpu_custom_call.1']
    #allocation5 [shape = 'u8[6144]{0}', space=vmem, size = 0x1800, scoped, tag = 'input window, operand 1, single buffered']
    #allocation6 [shape = 's32[1]{0}', space=sflag, size = 0x4, scoped, tag = 'scoped memory for tpu_custom_call.1']
    #allocation7 [shape = 'u8[65536]{0}', space=vmem, size = 0x10000, scoped, tag = 'output window, operand 0']
    %8 = vsyncpa [#allocation3], 0
    %s9 = scalar_lea.sflag [#allocation3], 1
    %10 = vsyncpa %s9, 0
    %11 = vsyncpa [#allocation6], 0
    %12 = vsyncpa [#allocation4], 0
    %s13 = scalar_lea.sflag [#allocation4], 1
    %14 = vsyncpa %s13, 0
    loop: start=0, step=1, limit=4
    $region2: #{tpu_custom_call.1} parent=1 // loop_pre_header
      _
    $region3: #{tpu_custom_call.1} parent=1 // loop_header
      %s16 = sphi 0, %s20
      %p17 = scmp.ge.s32.totalorder %s16, 4
      %s23 = sphi 0, %s35
      %s24 = sphi 0, %s31
      %s25 = sphi 0, %s23
      %s26 = sphi 0, %s24
      %s27 = sphi 0, %s25
      %s28 = sphi 0, %s26
      %s40 = sphi 0, %s42
      %s43 = sphi 0, %s40
      %s44 = sphi 0, %s43
      %s60 = sphi 0, %s44
      %s66 = sphi 0, %s68
      %s69 = sphi 0, %s66
      %s70 = sphi 0, %s69
      %s86 = sphi 0, %s70
      %s92 = sphi 0, %s94
      %s95 = sphi 0, %s92
      %s96 = sphi 0, %s95
      %s112 = sphi 0, %s96
      %s120 = sphi 0, %s122
      %s123 = sphi 0, %s120
      %s124 = sphi 0, %s123
      %s140 = sphi 0, %s124
    $region4: #{tpu_custom_call.1} parent=1 // loop_header_branch
      %19 = sbr.rel (%p17) target = $region8
    $region5: #{tpu_custom_call.1} parent=1 // loop_body
      %s21 = ssub.s32 %s16, 1
      %s22 = ssub.s32 %s16, 2
      %s29 = sadd.s32 1, %s24
      %p30 = scmp.ge.s32.totalorder %s29, 2
      %s31 = scalar_select %p30, 0, %s29
      %s32 = sadd.s32 1, %s23
      %s33 = scalar_select %p30, %s32, %s23
      %p34 = scmp.ge.s32.totalorder %s33, 1
      %s35 = scalar_select %p34, 0, %s33
      %s36 = ssub.s32 %s24, %s31
      %s37 = ssub.s32 %s23, %s35
      %s38 = sor.u32 %s36, %s37
      %p39 = scmp.eq.s32.totalorder %s38, 0
      %s41 = sadd.s32 %s40, 1
      %s42 = scalar_select %p39, %s40, %s41
      %p45 = pneg %p39
      %p46 = scmp.eq.s32.totalorder %s16, 1
      %p47 = por %p45, %p46
      %p48 = scmp.ne.s32.totalorder %s40, %s43
      %p49 = scmp.eq.s32.totalorder %s16, 0
      %p50 = por %p48, %p49
      %p51 = scmp.ne.s32.totalorder %s40, %s43
      %p52 = scmp.eq.s32.totalorder %s21, 1
      %p53 = por %p51, %p52
      %p54 = scmp.ne.s32.totalorder %s43, %s44
      %p55 = scmp.eq.s32.totalorder %s21, 0
      %p56 = por %p54, %p55
      %p57 = scmp.ne.s32.totalorder %s43, %s44
      %p58 = scmp.eq.s32.totalorder %s22, 1
      %p59 = por %p57, %p58
      %p61 = scmp.ne.s32.totalorder %s44, %s60
      %p62 = scmp.eq.s32.totalorder %s22, 0
      %p63 = por %p61, %p62
      %s64 = ssub.s32 %s23, %s35
      %p65 = scmp.eq.s32.totalorder %s64, 0
      %s67 = sadd.s32 %s66, 1
      %s68 = scalar_select %p65, %s66, %s67
      %p71 = pneg %p65
      %p72 = scmp.eq.s32.totalorder %s16, 1
      %p73 = por %p71, %p72
      %p74 = scmp.ne.s32.totalorder %s66, %s69
      %p75 = scmp.eq.s32.totalorder %s16, 0
      %p76 = por %p74, %p75
      %p77 = scmp.ne.s32.totalorder %s66, %s69
      %p78 = scmp.eq.s32.totalorder %s21, 1
      %p79 = por %p77, %p78
      %p80 = scmp.ne.s32.totalorder %s69, %s70
      %p81 = scmp.eq.s32.totalorder %s21, 0
      %p82 = por %p80, %p81
      %p83 = scmp.ne.s32.totalorder %s69, %s70
      %p84 = scmp.eq.s32.totalorder %s22, 1
      %p85 = por %p83, %p84
      %p87 = scmp.ne.s32.totalorder %s70, %s86
      %p88 = scmp.eq.s32.totalorder %s22, 0
      %p89 = por %p87, %p88
      %s90 = ssub.s32 %s23, %s35
      %p91 = scmp.eq.s32.totalorder %s90, 0
      %s93 = sadd.s32 %s92, 1
      %s94 = scalar_select %p91, %s92, %s93
      %p97 = pneg %p91
      %p98 = scmp.eq.s32.totalorder %s16, 1
      %p99 = por %p97, %p98
      %p100 = scmp.ne.s32.totalorder %s92, %s95
      %p101 = scmp.eq.s32.totalorder %s16, 0
      %p102 = por %p100, %p101
      %p103 = scmp.ne.s32.totalorder %s92, %s95
      %p104 = scmp.eq.s32.totalorder %s21, 1
      %p105 = por %p103, %p104
      %p106 = scmp.ne.s32.totalorder %s95, %s96
      %p107 = scmp.eq.s32.totalorder %s21, 0
      %p108 = por %p106, %p107
      %p109 = scmp.ne.s32.totalorder %s95, %s96
      %p110 = scmp.eq.s32.totalorder %s22, 1
      %p111 = por %p109, %p110
      %p113 = scmp.ne.s32.totalorder %s96, %s112
      %p114 = scmp.eq.s32.totalorder %s22, 0
      %p115 = por %p113, %p114
      %s116 = ssub.s32 %s24, %s31
      %s117 = ssub.s32 %s23, %s35
      %s118 = sor.u32 %s116, %s117
      %p119 = scmp.eq.s32.totalorder %s118, 0
      %s121 = sadd.s32 %s120, 1
      %s122 = scalar_select %p119, %s120, %s121
      %p125 = pneg %p119
      %p126 = scmp.eq.s32.totalorder %s16, 1
      %p127 = por %p125, %p126
      %p128 = scmp.ne.s32.totalorder %s120, %s123
      %p129 = scmp.eq.s32.totalorder %s16, 0
      %p130 = por %p128, %p129
      %p131 = scmp.ne.s32.totalorder %s120, %s123
      %p132 = scmp.eq.s32.totalorder %s21, 1
      %p133 = por %p131, %p132
      %p134 = scmp.ne.s32.totalorder %s123, %s124
      %p135 = scmp.eq.s32.totalorder %s21, 0
      %p136 = por %p134, %p135
      %p137 = scmp.ne.s32.totalorder %s123, %s124
      %p138 = scmp.eq.s32.totalorder %s22, 1
      %p139 = por %p137, %p138
      %p141 = scmp.ne.s32.totalorder %s124, %s140
      %p142 = scmp.eq.s32.totalorder %s22, 0
      %p143 = por %p141, %p142
      %p144 = scmp.le.s32.totalorder 1, %s16
      %p145 = scmp.lt.s32.totalorder %s16, 3
      %p146 = pnand %p144, %p145
      %p147 = pneg %p146
      // Predicated region
      $region9: #{tpu_custom_call.1} parent=5 // pred_check
        _
      $region10: #{tpu_custom_call.1} parent=5 // pred_check_branch
        %149 = sbr.rel (%p146) target = $region12
      $region11: #{tpu_custom_call.1} parent=5 // pred_region
        %s150 = ssub.s32 %s16, 1
        // Predicated region
        $region13: #{tpu_custom_call.1} parent=11 // pred_check
          %p151 = pneg %p82
        $region14: #{tpu_custom_call.1} parent=11 // pred_check_branch
          %153 = sbr.rel (%p151) target = $region16
        $region15: #{tpu_custom_call.1} parent=11 // pred_region
          %s155 = ssub.s32 192, 192
          %156 = vsyncadd [#allocation6], %s155
          %s157 = smul.addr %s25, 64
          %s158 = scalar_lea.hbm %s1, %s157
          %s159 = sshll.u32 [#allocation5], 4
          %s160 = int_to_ptr.vmem [resolvable:$true] %s159
          %165 = dma.hbm_to_vmem [thread:$0]  %s158, 192, %s160, [#allocation6], 64, 64, 4
        $region16: #{tpu_custom_call.1} parent=11 // pred_fallthru
          _
        // Predicated region
        $region17: #{tpu_custom_call.1} parent=11 // pred_check
          %p166 = pneg %p108
        $region18: #{tpu_custom_call.1} parent=11 // pred_check_branch
          %168 = sbr.rel (%p166) target = $region20
        $region19: #{tpu_custom_call.1} parent=11 // pred_region
          %p169 = scmp.lt.s32.totalorder %s25, 0
          %s170 = scalar_select %p169, %s25, 0
          %s171 = scalar_lea.vmem %s2, %s170
        $region20: #{tpu_custom_call.1} parent=11 // pred_fallthru
          _
      $region12: #{tpu_custom_call.1} parent=5 // pred_fallthru
        _
      %p172 = scmp.lt.s32.totalorder %s16, 2
      // Predicated region
      $region21: #{tpu_custom_call.1} parent=5 // pred_check
        %p173 = pneg %p172
      $region22: #{tpu_custom_call.1} parent=5 // pred_check_branch
        %175 = sbr.rel (%p173) target = $region24
      $region23: #{tpu_custom_call.1} parent=5 // pred_region
        // Predicated region
        $region25: #{tpu_custom_call.1} parent=23 // pred_check
          %p176 = pneg %p50
        $region26: #{tpu_custom_call.1} parent=23 // pred_check_branch
          %178 = sbr.rel (%p176) target = $region28
        $region27: #{tpu_custom_call.1} parent=23 // pred_region
          %s179 = sand.u32 %s40, 1
          %s180 = scalar_lea.sflag [#allocation3], %s179
          %s181 = sand.u32 %s40, 1
          %s182 = smul.addr %s181, 64
          %s183 = scalar_lea.vmem [#allocation2], %s182
          %s185 = ssub.s32 1024, 1024
          %186 = vsyncadd %s180, %s185
          %s187 = smul.addr %s24, 8
          %s188 = sadd.s32 %s23, %s187
          %s189 = smul.addr %s188, 128
          %s190 = scalar_lea.hbm %s0, %s189
          %s191 = sshll.u32 %s183, 4
          %s192 = int_to_ptr.vmem [resolvable:$true] %s191
          %197 = dma.hbm_to_vmem [thread:$0]  %s190, 1024, %s192, %s180, 128, 128, 8
        $region28: #{tpu_custom_call.1} parent=23 // pred_fallthru
          _
      $region24: #{tpu_custom_call.1} parent=5 // pred_fallthru
        _
      %p198 = scmp.le.s32.totalorder 1, %s16
      %p199 = scmp.lt.s32.totalorder %s16, 3
      %p200 = pnand %p198, %p199
      %p201 = pneg %p200
      // Predicated region
      $region29: #{tpu_custom_call.1} parent=5 // pred_check
        _
      $region30: #{tpu_custom_call.1} parent=5 // pred_check_branch
        %203 = sbr.rel (%p200) target = $region32
      $region31: #{tpu_custom_call.1} parent=5 // pred_region
        %s204 = ssub.s32 %s16, 1
        %s205 = sand.u32 %s43, 1
        %s206 = scalar_lea.sflag [#allocation3], %s205
        %s207 = sand.u32 %s43, 1
        %s208 = smul.addr %s207, 64
        %s209 = scalar_lea.vmem [#allocation2], %s208
        // Predicated region
        $region33: #{tpu_custom_call.1} parent=31 // pred_check
          %p210 = pneg %p56
        $region34: #{tpu_custom_call.1} parent=31 // pred_check_branch
          %212 = sbr.rel (%p210) target = $region36
        $region35: #{tpu_custom_call.1} parent=31 // pred_region
          %213 = dma.done %s206, 1024
        $region36: #{tpu_custom_call.1} parent=31 // pred_fallthru
          _
        // Predicated region
        $region37: #{tpu_custom_call.1} parent=31 // pred_check
          %p214 = pneg %p82
        $region38: #{tpu_custom_call.1} parent=31 // pred_check_branch
          %216 = sbr.rel (%p214) target = $region40
        $region39: #{tpu_custom_call.1} parent=31 // pred_region
          %217 = dma.done [#allocation6], 192
        $region40: #{tpu_custom_call.1} parent=31 // pred_fallthru
          _
        %s218 = sand.u32 %s43, 1
        %s219 = scalar_lea.sflag [#allocation3], %s218
        %s220 = sand.u32 %s43, 1
        %s221 = smul.addr %s220, 64
        %s222 = scalar_lea.vmem [#allocation2], %s221
        %p223 = pneg %p56
        %p224 = pneg %p53
        %p225 = pneg %p82
        %p226 = pneg %p79
        %p227 = scmp.lt.s32.totalorder %s25, 0
        %s228 = scalar_select %p227, %s25, 0
        %s229 = scalar_lea.vmem %s2, %s228
        %p230 = pneg %p108
        %p231 = pneg %p105
        %p232 = pneg %p136
        %p233 = pneg %p133
        %s234 = sand.u32 %s123, 1
        %s235 = scalar_lea.sflag [#allocation4], %s234
        %s236 = sand.u32 %s123, 1
        %s237 = smul.addr %s236, 64
        %s238 = scalar_lea.vmem [#allocation7], %s237
        %p239 = scmp.lt.s32.totalorder %s25, 0
        %s240 = scalar_select %p239, %s25, 0
        %s241 = scalar_lea.vmem %s2, %s240
        %v242 = vld [vmem:[#allocation5] sm:$0x1]
        %v243 = vld [vmem:[#allocation5 + $0x1] sm:$0x1]
        %v244 = vld [vmem:[#allocation5 + $0x2] sm:$0x1]
        %s245 = scalar_lea.vmem [#allocation5], 4
        %v246 = vld [vmem:[%s245] sm:$0x1]
        %v247 = vld [vmem:[%s245 + $0x1] sm:$0x1]
        %v248 = vld [vmem:[%s245 + $0x2] sm:$0x1]
        %s249 = scalar_lea.vmem [#allocation5], 8
        %v250 = vld [vmem:[%s249] sm:$0x1]
        %v251 = vld [vmem:[%s249 + $0x1] sm:$0x1]
        %v252 = vld [vmem:[%s249 + $0x2] sm:$0x1]
        %v253 = vld [vmem:[%s241] sm:$0x1]
        %v254 = vlaneseq
        %v255 = vshrl.u32 %v254, 7
        %vm256 = vcmp.ge.s32.totalorder %v255, 1
        %vm257 = vcmp.le.s32.totalorder %v255, 6
        %v258 = vld [vmem:[%s209] sm:$0xff]
        %s259 = scalar_lea.vmem %s209, 8 [#allocation2]
        %v260 = vld [vmem:[%s259] sm:$0xff]
        %v261 = vlaneseq
        %v262 = vshrl.u32 %v261, 7
        %v263 = vsub.s32 0, %v262
        %v264 = vrot.slane %v247, %v263
        %v265 = vmul.f32 %v258, %v264
        %v266 = vlaneseq
        %v267 = vshrl.u32 %v266, 7
        %v268 = vsub.s32 0, %v267
        %v269 = vrot.slane %v251, %v268
        %v270 = vmul.f32 %v260, %v269
        %v271 = vadd.f32 %v265, %v270
        %v272 = vlaneseq
        %v273 = vshrl.u32 %v272, 7
        %v274 = vsub.s32 0, %v273
        %v275 = vrot.slane %v246, %v274
        %v276 = vmul.f32 %v258, %v275
        %v277 = vlaneseq
        %v278 = vshrl.u32 %v277, 7
        %v279 = vsub.s32 0, %v278
        %v280 = vrot.slane %v250, %v279
        %v281 = vmul.f32 %v260, %v280
        %v282 = vadd.f32 %v276, %v281
        %v283 = vrot.slane %v282, 7
        %v284 = vsel %vm256, 1, 0
        %vm285 = vcmp.eq.s32.totalorder %v284, 1
        %v286 = vsel %vm285, %v283, 0.0
        %v287 = vadd.f32 %v271, %v286
        %v288 = vlaneseq
        %v289 = vshrl.u32 %v288, 7
        %v290 = vsub.s32 0, %v289
        %v291 = vrot.slane %v248, %v290
        %v292 = vmul.f32 %v258, %v291
        %v293 = vlaneseq
        %v294 = vshrl.u32 %v293, 7
        %v295 = vsub.s32 0, %v294
        %v296 = vrot.slane %v252, %v295
        %v297 = vmul.f32 %v260, %v296
        %v298 = vadd.f32 %v292, %v297
        %v299 = vrot.slane %v298, 1
        %v300 = vsel %vm257, 1, 0
        %vm301 = vcmp.eq.s32.totalorder %v300, 1
        %v302 = vsel %vm301, %v299, 0.0
        %v303 = vadd.f32 %v287, %v302
        %v305 = vlaneseq
        %v306 = vshrl.u32 %v305, 7
        %v307 = vsub.s32 0, %v306
        %v308 = vrot.slane %v253, %v307
        %v310 = vadd.f32 %v303, %v308
        %311 = vst [vmem:[%s238] sm:$0xff] %v310
        %v312 = vld [vmem:[%s209] sm:$0xff]
        %v313 = vld [vmem:[%s259] sm:$0xff]
        %s314 = scalar_lea.vmem %s209, 16 [#allocation2]
        %v315 = vld [vmem:[%s314] sm:$0xff]
        %v316 = vlaneseq
        %v317 = vshrl.u32 %v316, 7
        %v318 = vsub.s32 0, %v317
        %v319 = vrot.slane %v243, %v318
        %v320 = vmul.f32 %v312, %v319
        %v321 = vmul.f32 %v313, %v264
        %v322 = vadd.f32 %v320, %v321
        %v323 = vmul.f32 %v315, %v269
        %v324 = vadd.f32 %v322, %v323
        %v325 = vlaneseq
        %v326 = vshrl.u32 %v325, 7
        %v327 = vsub.s32 0, %v326
        %v328 = vrot.slane %v242, %v327
        %v329 = vmul.f32 %v312, %v328
        %v330 = vmul.f32 %v313, %v275
        %v331 = vadd.f32 %v329, %v330
        %v332 = vmul.f32 %v315, %v280
        %v333 = vadd.f32 %v331, %v332
        %v334 = vrot.slane %v333, 7
        %v335 = vsel %vm285, %v334, 0.0
        %v336 = vadd.f32 %v324, %v335
        %v337 = vlaneseq
        %v338 = vshrl.u32 %v337, 7
        %v339 = vsub.s32 0, %v338
        %v340 = vrot.slane %v244, %v339
        %v341 = vmul.f32 %v312, %v340
        %v342 = vmul.f32 %v313, %v291
        %v343 = vadd.f32 %v341, %v342
        %v344 = vmul.f32 %v315, %v296
        %v345 = vadd.f32 %v343, %v344
        %v346 = vrot.slane %v345, 1
        %v347 = vsel %vm301, %v346, 0.0
        %v348 = vadd.f32 %v336, %v347
        %v349 = vadd.f32 %v348, %v308
        %s350 = scalar_lea.vmem %s238, 8 [#allocation7]
        %351 = vst [vmem:[%s350] sm:$0xff] %v349
        %v352 = vld [vmem:[%s259] sm:$0xff]
        %v353 = vld [vmem:[%s314] sm:$0xff]
        %s354 = scalar_lea.vmem %s209, 24 [#allocation2]
        %v355 = vld [vmem:[%s354] sm:$0xff]
        %v356 = vmul.f32 %v352, %v319
        %v357 = vmul.f32 %v353, %v264
        %v358 = vadd.f32 %v356, %v357
        %v359 = vmul.f32 %v355, %v269
        %v360 = vadd.f32 %v358, %v359
        %v361 = vmul.f32 %v352, %v328
        %v362 = vmul.f32 %v353, %v275
        %v363 = vadd.f32 %v361, %v362
        %v364 = vmul.f32 %v355, %v280
        %v365 = vadd.f32 %v363, %v364
        %v366 = vrot.slane %v365, 7
        %v367 = vsel %vm285, %v366, 0.0
        %v368 = vadd.f32 %v360, %v367
        %v369 = vmul.f32 %v352, %v340
        %v370 = vmul.f32 %v353, %v291
        %v371 = vadd.f32 %v369, %v370
        %v372 = vmul.f32 %v355, %v296
        %v373 = vadd.f32 %v371, %v372
        %v374 = vrot.slane %v373, 1
        %v375 = vsel %vm301, %v374, 0.0
        %v376 = vadd.f32 %v368, %v375
        %v377 = vadd.f32 %v376, %v308
        %s378 = scalar_lea.vmem %s238, 16 [#allocation7]
        %379 = vst [vmem:[%s378] sm:$0xff] %v377
        %v380 = vld [vmem:[%s314] sm:$0xff]
        %v381 = vld [vmem:[%s354] sm:$0xff]
        %s382 = scalar_lea.vmem %s209, 32 [#allocation2]
        %v383 = vld [vmem:[%s382] sm:$0xff]
        %v384 = vmul.f32 %v380, %v319
        %v385 = vmul.f32 %v381, %v264
        %v386 = vadd.f32 %v384, %v385
        %v387 = vmul.f32 %v383, %v269
        %v388 = vadd.f32 %v386, %v387
        %v389 = vmul.f32 %v380, %v328
        %v390 = vmul.f32 %v381, %v275
        %v391 = vadd.f32 %v389, %v390
        %v392 = vmul.f32 %v383, %v280
        %v393 = vadd.f32 %v391, %v392
        %v394 = vrot.slane %v393, 7
        %v395 = vsel %vm285, %v394, 0.0
        %v396 = vadd.f32 %v388, %v395
        %v397 = vmul.f32 %v380, %v340
        %v398 = vmul.f32 %v381, %v291
        %v399 = vadd.f32 %v397, %v398
        %v400 = vmul.f32 %v383, %v296
        %v401 = vadd.f32 %v399, %v400
        %v402 = vrot.slane %v401, 1
        %v403 = vsel %vm301, %v402, 0.0
        %v404 = vadd.f32 %v396, %v403
        %v405 = vadd.f32 %v404, %v308
        %s406 = scalar_lea.vmem %s238, 24 [#allocation7]
        %407 = vst [vmem:[%s406] sm:$0xff] %v405
        %v408 = vld [vmem:[%s354] sm:$0xff]
        %v409 = vld [vmem:[%s382] sm:$0xff]
        %s410 = scalar_lea.vmem %s209, 40 [#allocation2]
        %v411 = vld [vmem:[%s410] sm:$0xff]
        %v412 = vmul.f32 %v408, %v319
        %v413 = vmul.f32 %v409, %v264
        %v414 = vadd.f32 %v412, %v413
        %v415 = vmul.f32 %v411, %v269
        %v416 = vadd.f32 %v414, %v415
        %v417 = vmul.f32 %v408, %v328
        %v418 = vmul.f32 %v409, %v275
        %v419 = vadd.f32 %v417, %v418
        %v420 = vmul.f32 %v411, %v280
        %v421 = vadd.f32 %v419, %v420
        %v422 = vrot.slane %v421, 7
        %v423 = vsel %vm285, %v422, 0.0
        %v424 = vadd.f32 %v416, %v423
        %v425 = vmul.f32 %v408, %v340
        %v426 = vmul.f32 %v409, %v291
        %v427 = vadd.f32 %v425, %v426
        %v428 = vmul.f32 %v411, %v296
        %v429 = vadd.f32 %v427, %v428
        %v430 = vrot.slane %v429, 1
        %v431 = vsel %vm301, %v430, 0.0
        %v432 = vadd.f32 %v424, %v431
        %v433 = vadd.f32 %v432, %v308
        %s434 = scalar_lea.vmem %s238, 32 [#allocation7]
        %435 = vst [vmem:[%s434] sm:$0xff] %v433
        %v436 = vld [vmem:[%s382] sm:$0xff]
        %v437 = vld [vmem:[%s410] sm:$0xff]
        %s438 = scalar_lea.vmem %s209, 48 [#allocation2]
        %v439 = vld [vmem:[%s438] sm:$0xff]
        %v440 = vmul.f32 %v436, %v319
        %v441 = vmul.f32 %v437, %v264
        %v442 = vadd.f32 %v440, %v441
        %v443 = vmul.f32 %v439, %v269
        %v444 = vadd.f32 %v442, %v443
        %v445 = vmul.f32 %v436, %v328
        %v446 = vmul.f32 %v437, %v275
        %v447 = vadd.f32 %v445, %v446
        %v448 = vmul.f32 %v439, %v280
        %v449 = vadd.f32 %v447, %v448
        %v450 = vrot.slane %v449, 7
        %v451 = vsel %vm285, %v450, 0.0
        %v452 = vadd.f32 %v444, %v451
        %v453 = vmul.f32 %v436, %v340
        %v454 = vmul.f32 %v437, %v291
        %v455 = vadd.f32 %v453, %v454
        %v456 = vmul.f32 %v439, %v296
        %v457 = vadd.f32 %v455, %v456
        %v458 = vrot.slane %v457, 1
        %v459 = vsel %vm301, %v458, 0.0
        %v460 = vadd.f32 %v452, %v459
        %v461 = vadd.f32 %v460, %v308
        %s462 = scalar_lea.vmem %s238, 40 [#allocation7]
        %463 = vst [vmem:[%s462] sm:$0xff] %v461
        %v464 = vld [vmem:[%s410] sm:$0xff]
        %v465 = vld [vmem:[%s438] sm:$0xff]
        %s466 = scalar_lea.vmem %s209, 56 [#allocation2]
        %v467 = vld [vmem:[%s466] sm:$0xff]
        %v468 = vmul.f32 %v464, %v319
        %v469 = vmul.f32 %v465, %v264
        %v470 = vadd.f32 %v468, %v469
        %v471 = vmul.f32 %v467, %v269
        %v472 = vadd.f32 %v470, %v471
        %v473 = vmul.f32 %v464, %v328
        %v474 = vmul.f32 %v465, %v275
        %v475 = vadd.f32 %v473, %v474
        %v476 = vmul.f32 %v467, %v280
        %v477 = vadd.f32 %v475, %v476
        %v478 = vrot.slane %v477, 7
        %v479 = vsel %vm285, %v478, 0.0
        %v480 = vadd.f32 %v472, %v479
        %v481 = vmul.f32 %v464, %v340
        %v482 = vmul.f32 %v465, %v291
        %v483 = vadd.f32 %v481, %v482
        %v484 = vmul.f32 %v467, %v296
        %v485 = vadd.f32 %v483, %v484
        %v486 = vrot.slane %v485, 1
        %v487 = vsel %vm301, %v486, 0.0
        %v488 = vadd.f32 %v480, %v487
        %v489 = vadd.f32 %v488, %v308
        %s490 = scalar_lea.vmem %s238, 48 [#allocation7]
        %491 = vst [vmem:[%s490] sm:$0xff] %v489
        %v492 = vld [vmem:[%s438] sm:$0xff]
        %v493 = vld [vmem:[%s466] sm:$0xff]
        %v494 = vmul.f32 %v492, %v319
        %v495 = vmul.f32 %v493, %v264
        %v496 = vadd.f32 %v494, %v495
        %v497 = vmul.f32 %v492, %v328
        %v498 = vmul.f32 %v493, %v275
        %v499 = vadd.f32 %v497, %v498
        %v500 = vrot.slane %v499, 7
        %v501 = vsel %vm285, %v500, 0.0
        %v502 = vadd.f32 %v496, %v501
        %v503 = vmul.f32 %v492, %v340
        %v504 = vmul.f32 %v493, %v291
        %v505 = vadd.f32 %v503, %v504
        %v506 = vrot.slane %v505, 1
        %v507 = vsel %vm301, %v506, 0.0
        %v508 = vadd.f32 %v502, %v507
        %v509 = vadd.f32 %v508, %v308
        %s510 = scalar_lea.vmem %s238, 56 [#allocation7]
        %511 = vst [vmem:[%s510] sm:$0xff] %v509
        %s512 = sand.u32 %s123, 1
        %s513 = scalar_lea.sflag [#allocation4], %s512
        %s514 = sand.u32 %s123, 1
        %s515 = smul.addr %s514, 64
        %s516 = scalar_lea.vmem [#allocation7], %s515
        // Predicated region
        $region41: #{tpu_custom_call.1} parent=31 // pred_check
          %p517 = pneg %p133
        $region42: #{tpu_custom_call.1} parent=31 // pred_check_branch
          %519 = sbr.rel (%p517) target = $region44
        $region43: #{tpu_custom_call.1} parent=31 // pred_region
          %s521 = ssub.s32 1024, 1024
          %522 = vsyncadd %s513, %s521
          %s523 = smul.addr %s26, 8
          %s524 = sadd.s32 %s25, %s523
          %s525 = smul.addr %s524, 128
          %s526 = scalar_lea.hbm %s3, %s525
          %s527 = sshll.u32 %s516, 4
          %s528 = int_to_ptr.vmem [resolvable:$true] %s527
          %533 = dma.vmem_to_hbm [thread:$0]  %s528, 1024, %s526, %s513, 128, 128, 8
        $region44: #{tpu_custom_call.1} parent=31 // pred_fallthru
          _
      $region32: #{tpu_custom_call.1} parent=5 // pred_fallthru
        _
      %p534 = scmp.le.s32.totalorder 2, %s16
      // Predicated region
      $region45: #{tpu_custom_call.1} parent=5 // pred_check
        %p535 = pneg %p534
      $region46: #{tpu_custom_call.1} parent=5 // pred_check_branch
        %537 = sbr.rel (%p535) target = $region48
      $region47: #{tpu_custom_call.1} parent=5 // pred_region
        %s538 = ssub.s32 %s16, 2
        // Predicated region
        $region49: #{tpu_custom_call.1} parent=47 // pred_check
          %p539 = pneg %p139
        $region50: #{tpu_custom_call.1} parent=47 // pred_check_branch
          %541 = sbr.rel (%p539) target = $region52
        $region51: #{tpu_custom_call.1} parent=47 // pred_region
          %s542 = sand.u32 %s124, 1
          %s543 = scalar_lea.sflag [#allocation4], %s542
          %s544 = sand.u32 %s124, 1
          %s545 = smul.addr %s544, 64
          %s546 = scalar_lea.vmem [#allocation7], %s545
          %547 = dma.done %s543, 1024
        $region52: #{tpu_custom_call.1} parent=47 // pred_fallthru
          _
      $region48: #{tpu_custom_call.1} parent=5 // pred_fallthru
        _
    $region6: #{tpu_custom_call.1} parent=1 // loop_footer
      %s20 = sadd.s32 1, %s16
    $region7: #{tpu_custom_call.1} parent=1 // loop_footer_branch
      %15 = sbr.rel target = $region3
    $region8: #{tpu_custom_call.1} parent=1 // loop_exit
      _
    %548 = vsyncpa [#allocation3], 1
    %s549 = scalar_lea.sflag [#allocation3], 1
    %550 = vsyncpa %s549, 1
    %551 = vsyncpa [#allocation6], 1
    %552 = vsyncpa [#allocation4], 1
    %s553 = scalar_lea.sflag [#allocation4], 1
    %554 = vsyncpa %s553, 1

</llo_original>
